<compile_context>
chip_gen: v7x
topology: tpu7x:2x2x1
jax: 0.10.0
libtpu: 0.0.40
codegen_flags: <defaults>
</compile_context>

<pallas_src>
import functools

import numpy as np
import jax
import jax.numpy as jnp
from jax import lax
from jax.experimental import pallas as pl
from jax.experimental.pallas import tpu as pltpu


def _round_up(x, m):
    return (x + m - 1) // m * m


# -------- Pass 1: transposed conv matmul + per-tile per-channel sum / sum-of-squares ----
def _conv_stats_kernel(p_ref, w_ref, stats_ref, *, c_rows):
    # p_ref: (CKKp, TM) bf16   w_ref: (Cs, CKKp) bf16 (resident across the grid)
    # stats_ref: (2*Cs, 128) f32 — rows [0,Cs) = sum, rows [Cs,2*Cs) = sum of squares
    y = jnp.dot(w_ref[...], p_ref[...], preferred_element_type=jnp.float32)  # (Cs, TM) f32
    s = jnp.sum(y, axis=1, keepdims=True)          # (Cs, 1)  lane reduction (XLU slot)
    ss = jnp.sum(y * y, axis=1, keepdims=True)     # (Cs, 1)
    lanes = stats_ref.shape[1]
    stats_ref[0:c_rows, :] = jnp.broadcast_to(s, (c_rows, lanes))
    stats_ref[c_rows:2 * c_rows, :] = jnp.broadcast_to(ss, (c_rows, lanes))


# -------- Pass 2: recompute conv (MXU has huge slack) + folded BN affine + LeakyReLU ----
def _conv_bn_lrelu_kernel(p_ref, w_ref, a_ref, b_ref, o_ref, *, alpha):
    y = jnp.dot(w_ref[...], p_ref[...], preferred_element_type=jnp.float32)  # (Cs, TM) f32
    z = y * a_ref[...] + b_ref[...]                                          # (Cs,1) lane-bcast
    o_ref[...] = jnp.where(z > 0, z, alpha * z).astype(o_ref.dtype)


@functools.partial(jax.jit, static_argnames=("stride", "padding", "alpha", "eps"))
def d_block_forward(x_nchw, weight, gamma, beta, *, stride=2, padding=1,
                    alpha=0.2, eps=1e-5):
    """x_nchw: (N, C_in, H, W); weight: (C_out, C_in, K, K) (PyTorch layout)."""
    N, C_in, H, W = x_nchw.shape
    C_out, _, K, _ = weight.shape
    OH = (H + 2 * padding - K) // stride + 1
    OW = (W + 2 * padding - K) // stride + 1
    M = N * OH * OW
    CKK = C_in * K * K

    LANE = 128
    CKKp = _round_up(CKK, 16)   # bf16 sublane packing; stays on the SUBLANE axis (no 128 pad)
    Cs = _round_up(C_out, 8)    # f32 sublane tile for the output-channel axis

    # Lane tile over M: big tiles amortize the ~0.35us/step overhead, but keep >=8 tiles
    # when M allows so the "parallel" axis still splits across v7x's two TensorCores.
    TM = 4096
    if M <= TM:
        TM = _round_up(M, LANE)
    else:
        while TM > 512 and (M + TM - 1) // TM < 8:
            TM //= 2
    Mp = _round_up(M, TM)
    n_tiles = Mp // TM

    # ---- im2col, built directly in the transposed (CKK, M) layout, bf16 from the start.
    # TODO(synk): fold this into the kernel so the patch amplification never touches HBM.
    xp = jnp.pad(x_nchw.astype(jnp.bfloat16),
                 ((0, 0), (0, 0), (padding, padding), (padding, padding)))
    cols = []
    for kh in range(K):
        for kw in range(K):
            cols.append(xp[:, :, kh:kh + stride * OH:stride, kw:kw + stride * OW:stride])
    # (K, K, N, C_in, OH, OW) -> (C_in, K, K, N, OH, OW) -> (CKK, M): one transpose/copy.
    patches = jnp.stack(cols, axis=0).reshape(K, K, N, C_in, OH, OW)
    patches = jnp.transpose(patches, (3, 0, 1, 2, 4, 5)).reshape(CKK, M)
    patches = jnp.pad(patches, ((0, CKKp - CKK), (0, Mp - M)))   # pad cols/rows are exact zeros

    # weight (C_out, C_in, K, K) -> (Cs, CKKp) bf16; padded rows/cols are zero.
    w_t = jnp.pad(weight.reshape(C_out, CKK).astype(jnp.bfloat16),
                  ((0, Cs - C_out), (0, CKKp - CKK)))

    cparams = pltpu.CompilerParams(
        dimension_semantics=("parallel",),       # row-tile axis feeds both v7x TCs
        vmem_limit_bytes=32 * 1024 * 1024,       # working set ~1-2 MB; safe on v5e/v6e/v7x
    )

    p_spec = pl.BlockSpec((CKKp, TM), lambda i: (0, i))
    w_spec = pl.BlockSpec((Cs, CKKp), lambda i: (0, 0))

    # ---- pass 1: stats only (no conv intermediate ever written to HBM) ----
    stats = pl.pallas_call(
        functools.partial(_conv_stats_kernel, c_rows=Cs),
        grid=(n_tiles,),
        in_specs=[p_spec, w_spec],
        out_specs=pl.BlockSpec((2 * Cs, LANE), lambda i: (0, i)),
        out_shape=jax.ShapeDtypeStruct((2 * Cs, n_tiles * LANE), jnp.float32),
        compiler_params=cparams,
    )(patches, w_t)

    # ---- tiny global reduction + folded BN affine (plain JAX on (Cs,) vectors) ----
    stats = stats.reshape(2 * Cs, n_tiles, LANE)[:, :, 0].sum(axis=1)
    s, ss = stats[:Cs], stats[Cs:]
    mean = s / M                                    # padded lanes contribute exact zeros
    var = jnp.maximum(ss / M - mean * mean, 0.0)    # biased variance (BN training stats)
    gamma_p = jnp.pad(gamma.astype(jnp.float32), (0, Cs - C_out))
    beta_p = jnp.pad(beta.astype(jnp.float32), (0, Cs - C_out))
    a = gamma_p * lax.rsqrt(var + eps)              # padded channels: gamma=0 -> a=b=0
    b = beta_p - mean * a

    # ---- pass 2: recompute conv, y = a*x + b, LeakyReLU ----
    out_t = pl.pallas_call(
        functools.partial(_conv_bn_lrelu_kernel, alpha=alpha),
        grid=(n_tiles,),
        in_specs=[p_spec, w_spec,
                  pl.BlockSpec((Cs, 1), lambda i: (0, 0)),
                  pl.BlockSpec((Cs, 1), lambda i: (0, 0))],
        out_specs=pl.BlockSpec((Cs, TM), lambda i: (0, i)),
        out_shape=jax.ShapeDtypeStruct((Cs, Mp), jnp.float32),
        compiler_params=cparams,
    )(patches, w_t, a.reshape(Cs, 1), b.reshape(Cs, 1))

    # (Cs, Mp) -> slice real channels/rows -> (C_out, N, OH, OW) -> NCHW (tiny transpose).
    out = out_t[:C_out, :M].reshape(C_out, N, OH, OW)
    return jnp.transpose(out, (1, 0, 2, 3))


def _reference(x, w, gamma, beta, *, stride, padding, alpha, eps):
    y = lax.conv_general_dilated(
        x, w, window_strides=(stride, stride),
        padding=[(padding, padding), (padding, padding)],
        dimension_numbers=("NCHW", "OIHW", "NCHW"))
    mean = y.mean(axis=(0, 2, 3), keepdims=True)
    var = ((y - mean) ** 2).mean(axis=(0, 2, 3), keepdims=True)
    yn = (y - mean) * lax.rsqrt(var + eps)
    z = gamma.reshape(1, -1, 1, 1) * yn + beta.reshape(1, -1, 1, 1)
    return jnp.where(z > 0, z, alpha * z)


if __name__ == "__main__":
    key = jax.random.PRNGKey(0)
    k_x, k_w, k_g, k_b = jax.random.split(key, 4)

    # Small shapes consistent with the module: in_channels=3 (default),
    # out_channels=8, kernel=4, stride=2, padding=1.
    N, C_in, H, W = 2, 3, 16, 16
    C_out, K = 8, 4

    x = jax.random.normal(k_x, (N, C_in, H, W), dtype=jnp.float32)
    weight = 0.1 * jax.random.normal(k_w, (C_out, C_in, K, K), dtype=jnp.float32)
    gamma = 1.0 + 0.1 * jax.random.normal(k_g, (C_out,), dtype=jnp.float32)
    beta = 0.1 * jax.random.normal(k_b, (C_out,), dtype=jnp.float32)

    out = d_block_forward(x, weight, gamma, beta, stride=2, padding=1,
                          alpha=0.2, eps=1e-5)
    out = jax.block_until_ready(out)
    assert out.shape == (N, C_out, H // 2, W // 2), out.shape

    ref = _reference(x, weight, gamma, beta, stride=2, padding=1, alpha=0.2, eps=1e-5)
    np.testing.assert_allclose(np.asarray(out), np.asarray(ref), rtol=5e-2, atol=5e-2)
    print("KERNEL_OK")
</pallas_src>

<mosaic_0001>
module attributes {stable_mosaic.version = 11 : i64} {
  func.func @_conv_stats_kernel(%arg0: i32, %arg1: memref<48x128xbf16, #tpu.memory_space<vmem>>, %arg2: memref<8x48xbf16, #tpu.memory_space<vmem>>, %arg3: memref<16x128xf32, #tpu.memory_space<vmem>>) attributes {dimension_semantics = [#tpu.dimension_semantics<parallel>], iteration_bounds = array<i64: 1>, scalar_prefetch = 0 : i64, scratch_operands = 0 : i64, tpu.core_type = #tpu.core_type<tc>, window_params = [{transform_indices = @transform_0, window_bounds = array<i64: 48, 128>}, {pipeline_mode = #tpu.pipeline_mode<synchronous>, transform_indices = @transform_1, window_bounds = array<i64: 8, 48>}, {transform_indices = @transform_2, window_bounds = array<i64: 16, 128>}]} {
    %c0 = arith.constant 0 : index
    %c0_0 = arith.constant 0 : index
    %0 = vector.load %arg2[%c0, %c0_0] : memref<8x48xbf16, #tpu.memory_space<vmem>>, vector<8x48xbf16>
    %c0_1 = arith.constant 0 : index
    %c0_2 = arith.constant 0 : index
    %1 = vector.load %arg1[%c0_1, %c0_2] : memref<48x128xbf16, #tpu.memory_space<vmem>>, vector<48x128xbf16>
    %cst = arith.constant dense<0.000000e+00> : vector<8x128xf32>
    %2 = tpu.matmul %0, %1, %cst {dimension_numbers = #tpu.dot_dimension_numbers<[1], [0], [0], [1], [0, 0, 1, 1], [], []>} : vector<8x48xbf16>, vector<48x128xbf16>, vector<8x128xf32> -> vector<8x128xf32>
    %cst_3 = arith.constant dense<0.000000e+00> : vector<8xf32>
    %3 = vector.multi_reduction <add>, %2, %cst_3 [1] : vector<8x128xf32> to vector<8xf32>
    %4 = vector.shape_cast %3 : vector<8xf32> to vector<8x1xf32>
    %5 = arith.mulf %2, %2 : vector<8x128xf32>
    %cst_4 = arith.constant dense<0.000000e+00> : vector<8xf32>
    %6 = vector.multi_reduction <add>, %5, %cst_4 [1] : vector<8x128xf32> to vector<8xf32>
    %7 = vector.shape_cast %6 : vector<8xf32> to vector<8x1xf32>
    %8 = vector.shape_cast %4 : vector<8x1xf32> to vector<8x1xf32>
    %9 = vector.broadcast %8 : vector<8x1xf32> to vector<8x128xf32>
    %c0_5 = arith.constant 0 : index
    %c0_6 = arith.constant 0 : index
    %10 = vector.load %arg3[%c0_5, %c0_6] : memref<16x128xf32, #tpu.memory_space<vmem>>, vector<8x128xf32>
    tpu.vector_store %arg3[%c0_5, %c0_6], %9 {strides = array<i32>} : memref<16x128xf32, #tpu.memory_space<vmem>>, vector<8x128xf32>,
    %11 = vector.shape_cast %7 : vector<8x1xf32> to vector<8x1xf32>
    %12 = vector.broadcast %11 : vector<8x1xf32> to vector<8x128xf32>
    %c8 = arith.constant 8 : index
    %c0_7 = arith.constant 0 : index
    %13 = vector.load %arg3[%c8, %c0_7] : memref<16x128xf32, #tpu.memory_space<vmem>>, vector<8x128xf32>
    tpu.vector_store %arg3[%c8, %c0_7], %12 {strides = array<i32>} : memref<16x128xf32, #tpu.memory_space<vmem>>, vector<8x128xf32>,
    return
  }
  func.func @transform_0(%arg0: i32) -> (i32, i32) {
    %c0_i32 = arith.constant 0 : i32
    %c0_i32_0 = arith.constant 0 : i32
    return %c0_i32, %arg0 : i32, i32
  }
  func.func @transform_1(%arg0: i32) -> (i32, i32) {
    %c0_i32 = arith.constant 0 : i32
    %c0_i32_0 = arith.constant 0 : i32
    %c0_i32_1 = arith.constant 0 : i32
    return %c0_i32, %c0_i32_0 : i32, i32
  }
  func.func @transform_2(%arg0: i32) -> (i32, i32) {
    %c0_i32 = arith.constant 0 : i32
    %c0_i32_0 = arith.constant 0 : i32
    return %c0_i32, %arg0 : i32, i32
  }
}

module attributes {stable_mosaic.version = 11 : i64} {
  func.func @_conv_bn_lrelu_kernel(%arg0: i32, %arg1: memref<48x128xbf16, #tpu.memory_space<vmem>>, %arg2: memref<8x48xbf16, #tpu.memory_space<vmem>>, %arg3: memref<8x1xf32, #tpu.memory_space<vmem>>, %arg4: memref<8x1xf32, #tpu.memory_space<vmem>>, %arg5: memref<8x128xf32, #tpu.memory_space<vmem>>) attributes {dimension_semantics = [#tpu.dimension_semantics<parallel>], iteration_bounds = array<i64: 1>, scalar_prefetch = 0 : i64, scratch_operands = 0 : i64, tpu.core_type = #tpu.core_type<tc>, window_params = [{transform_indices = @transform_0, window_bounds = array<i64: 48, 128>}, {pipeline_mode = #tpu.pipeline_mode<synchronous>, transform_indices = @transform_1, window_bounds = array<i64: 8, 48>}, {pipeline_mode = #tpu.pipeline_mode<synchronous>, transform_indices = @transform_2, window_bounds = array<i64: 8, 1>}, {pipeline_mode = #tpu.pipeline_mode<synchronous>, transform_indices = @transform_3, window_bounds = array<i64: 8, 1>}, {transform_indices = @transform_4, window_bounds = array<i64: 8, 128>}]} {
    %c0 = arith.constant 0 : index
    %c0_0 = arith.constant 0 : index
    %0 = vector.load %arg2[%c0, %c0_0] : memref<8x48xbf16, #tpu.memory_space<vmem>>, vector<8x48xbf16>
    %c0_1 = arith.constant 0 : index
    %c0_2 = arith.constant 0 : index
    %1 = vector.load %arg1[%c0_1, %c0_2] : memref<48x128xbf16, #tpu.memory_space<vmem>>, vector<48x128xbf16>
    %cst = arith.constant dense<0.000000e+00> : vector<8x128xf32>
    %2 = tpu.matmul %0, %1, %cst {dimension_numbers = #tpu.dot_dimension_numbers<[1], [0], [0], [1], [0, 0, 1, 1], [], []>} : vector<8x48xbf16>, vector<48x128xbf16>, vector<8x128xf32> -> vector<8x128xf32>
    %c0_3 = arith.constant 0 : index
    %c0_4 = arith.constant 0 : index
    %3 = vector.load %arg3[%c0_3, %c0_4] : memref<8x1xf32, #tpu.memory_space<vmem>>, vector<8x1xf32>
    %4 = vector.broadcast %3 : vector<8x1xf32> to vector<8x128xf32>
    %5 = arith.mulf %2, %4 : vector<8x128xf32>
    %c0_5 = arith.constant 0 : index
    %c0_6 = arith.constant 0 : index
    %6 = vector.load %arg4[%c0_5, %c0_6] : memref<8x1xf32, #tpu.memory_space<vmem>>, vector<8x1xf32>
    %7 = vector.broadcast %6 : vector<8x1xf32> to vector<8x128xf32>
    %8 = arith.addf %5, %7 : vector<8x128xf32>
    %cst_7 = arith.constant 0.000000e+00 : f32
    %9 = vector.broadcast %cst_7 : f32 to vector<8x128xf32>
    %10 = arith.cmpf ogt, %8, %9 : vector<8x128xf32>
    %cst_8 = arith.constant 2.000000e-01 : f32
    %11 = vector.broadcast %cst_8 : f32 to vector<8x128xf32>
    %12 = arith.mulf %11, %8 : vector<8x128xf32>
    %13 = arith.select %10, %8, %12 : vector<8x128xi1>, vector<8x128xf32>
    %c0_9 = arith.constant 0 : index
    %c0_10 = arith.constant 0 : index
    %14 = vector.load %arg5[%c0_9, %c0_10] : memref<8x128xf32, #tpu.memory_space<vmem>>, vector<8x128xf32>
    tpu.vector_store %arg5[%c0_9, %c0_10], %13 {strides = array<i32>} : memref<8x128xf32, #tpu.memory_space<vmem>>, vector<8x128xf32>,
    return
  }
  func.func @transform_0(%arg0: i32) -> (i32, i32) {
    %c0_i32 = arith.constant 0 : i32
    %c0_i32_0 = arith.constant 0 : i32
    return %c0_i32, %arg0 : i32, i32
  }
  func.func @transform_1(%arg0: i32) -> (i32, i32) {
    %c0_i32 = arith.constant 0 : i32
    %c0_i32_0 = arith.constant 0 : i32
    %c0_i32_1 = arith.constant 0 : i32
    return %c0_i32, %c0_i32_0 : i32, i32
  }
  func.func @transform_2(%arg0: i32) -> (i32, i32) {
    %c0_i32 = arith.constant 0 : i32
    %c0_i32_0 = arith.constant 0 : i32
    %c0_i32_1 = arith.constant 0 : i32
    return %c0_i32, %c0_i32_0 : i32, i32
  }
  func.func @transform_3(%arg0: i32) -> (i32, i32) {
    %c0_i32 = arith.constant 0 : i32
    %c0_i32_0 = arith.constant 0 : i32
    %c0_i32_1 = arith.constant 0 : i32
    return %c0_i32, %c0_i32_0 : i32, i32
  }
  func.func @transform_4(%arg0: i32) -> (i32, i32) {
    %c0_i32 = arith.constant 0 : i32
    %c0_i32_0 = arith.constant 0 : i32
    return %c0_i32, %arg0 : i32, i32
  }
}

</mosaic_0001>

<llo_original>
// kernel: d_block_forward.3
$region0: #{d_block_forward.3}
  #allocation0 [shape = 'u32[]', space=smem, size = 0x4, offset = 0x4, fixed_abs, tag = 'smem constant byte address 0x4 - core index']
  #allocation1 [shape = 'u32[144,128]{1,0:T(1,128)}', space=vmem, size = 0x12000, scoped, tag = 'internal scratch']
  %s0 = inlined_call_operand.vmem [shape: bf16[48,128], index: 0, kind: input, shape index: {}]
  %s1 = inlined_call_operand.vmem [shape: bf16[8,48], index: 1, kind: input, shape index: {}]
  %s2 = inlined_call_operand.vmem [shape: f32[8,1], index: 2, kind: input, shape index: {}]
  %s3 = inlined_call_operand.vmem [shape: f32[8,1], index: 3, kind: input, shape index: {}]
  %s4 = inlined_call_operand.vmem [shape: f32[8,128], index: 4, kind: output, shape index: {}]
  %s5 = sld [smem:[#allocation0]]
  $region26: #{d_block_forward.3} parent=0
    _
  %s7 = ssub.s32 1, %s5
  %s8 = scalar_select 0, %s7, %s5
  // Predicated region
  $region2: #{d_block_forward.3} parent=0 // pred_check
    _
  $region3: #{d_block_forward.3} parent=0 // pred_check_branch
    %10 = sbr.rel (0) target = $region5
  $region4: #{d_block_forward.3} parent=0 // pred_region
    _
  $region5: #{d_block_forward.3} parent=0 // pred_fallthru
    _
  // Predicated region
  $region6: #{d_block_forward.3} parent=0 // pred_check
    _
  $region7: #{d_block_forward.3} parent=0 // pred_check_branch
    %12 = sbr.rel (0) target = $region9
  $region8: #{d_block_forward.3} parent=0 // pred_region
    _
  $region9: #{d_block_forward.3} parent=0 // pred_fallthru
    _
  // Predicated region
  $region10: #{d_block_forward.3} parent=0 // pred_check
    _
  $region11: #{d_block_forward.3} parent=0 // pred_check_branch
    %14 = sbr.rel (0) target = $region13
  $region12: #{d_block_forward.3} parent=0 // pred_region
    _
  $region13: #{d_block_forward.3} parent=0 // pred_fallthru
    _
  // Predicated region
  $region14: #{d_block_forward.3} parent=0 // pred_check
    _
  $region15: #{d_block_forward.3} parent=0 // pred_check_branch
    %16 = sbr.rel (0) target = $region17
  $region16: #{d_block_forward.3} parent=0 // pred_region
    _
  $region17: #{d_block_forward.3} parent=0 // pred_fallthru
    _
  %v18 = vld [vmem:[%s1] sm:$0xf]
  %v19 = vld [vmem:[%s0] sm:$0xf]
  %v20 = vld [vmem:[%s0 + $0x4] sm:$0xf]
  %v21 = vld [vmem:[%s0 + $0x8] sm:$0xf]
  %v22 = vld [vmem:[%s0 + $0xc] sm:$0xf]
  %v23 = vld [vmem:[%s0 + $0x10] sm:$0xf]
  %v24 = vld [vmem:[%s0 + $0x14] sm:$0xf]
  %v31 = vunpack.c.l.b16 %v19
  %v32 = vunpack.c.l.b16 %v20
  %v33 = vunpack.c.l.b16 %v21
  %v34 = vunpack.c.l.b16 %v22
  %v35 = vunpack.c.l.b16 %v23
  %v36 = vunpack.c.l.b16 %v24
  %v37 = vpack.c.b16 %v32, %v31
  %v38 = vpack.c.b16 %v34, %v33
  %v39 = vpack.c.b16 %v36, %v35
  %vm43 = vcmask 392192
  %v45 = vsel %vm43, %v18, 0
  %47 = vmatprep.subr.bf16.mxu0 0
  %48 = vmatpush1.bf16.msra.mxu0 %v37
  %49 = vmatprep.subr.bf16.mxu0 0
  %50 = vmatpush1.bf16.msra.mxu0 %v38
  %51 = vmatprep.subr.bf16.mxu0 0
  %52 = vmatpush1.bf16.msra.mxu0 %v39
  %53 = vmatprep.subr.bf16.mxu0 0
  %54 = vmatpush1.bf16.msra.mxu0 0
  %55 = vmatprep.subr.bf16.mxu0 0
  %56 = vmatpush1.bf16.msra.mxu0 0
  %57 = vmatprep.subr.bf16.mxu0 0
  %58 = vmatpush1.bf16.msra.mxu0 0
  %59 = vmatprep.subr.bf16.mxu0 0
  %60 = vmatpush1.bf16.msra.mxu0 0
  %61 = vmatprep.subr.bf16.mxu0 0
  %62 = vmatpush1.bf16.msra.mxu0 0
  %63 = vmatprep.subr.bf16.mxu0 0
  %64 = vmatpush1.bf16.msra.mxu0 0
  %65 = vmatprep.subr.bf16.mxu0 0
  %66 = vmatpush1.bf16.msra.mxu0 0
  %67 = vmatprep.subr.bf16.mxu0 0
  %68 = vmatpush1.bf16.msra.mxu0 0
  %69 = vmatprep.subr.bf16.mxu0 0
  %70 = vmatpush1.bf16.msra.mxu0 0
  %71 = vmatprep.subr.bf16.mxu0 0
  %72 = vmatpush1.bf16.msra.mxu0 0
  %73 = vmatprep.subr.bf16.mxu0 0
  %74 = vmatpush1.bf16.msra.mxu0 0
  %75 = vmatprep.subr.bf16.mxu0 0
  %76 = vmatpush1.bf16.msra.mxu0 0
  %77 = vmatprep.subr.bf16.mxu0 0
  %78 = vmatpush1.bf16.msra.mxu0 0
  %79 = vmatprep.mubr.bf16.mxu0 0
  %80 = vmatmul.mubr.bf16.gmra.mrb[0].mxu0 %v45
  %v81 = vpop.f32.mrb[0].mxu0
  %v82 = vadd.f32 0.0, %v81
  %v83 = vpop.f32.mrb[0].mxu0
  %v84 = vpop.f32.mrb[0].mxu0
  %v85 = vpop.f32.mrb[0].mxu0
  %86 = vdwg.mxu0
  %v87 = vld [vmem:[%s2] sm:$0xff]
  %89 = vset.pattern.permute.xlu0 0
  %90 = vperm.xlu0 %89, %v87
  %v91 = vpop.permute.xlu0 %90
  %v93 = vmul.f32 %v82, %v91
  %v94 = vld [vmem:[%s3] sm:$0xff]
  %96 = vset.pattern.permute.xlu0 0
  %97 = vperm.xlu0 %96, %v94
  %v98 = vpop.permute.xlu0 %97
  %v100 = vadd.f32 %v93, %v98
  %vm101 = vcmp.gt.f32.partialorder %v100, 0.0
  %v102 = vmul.f32 %v100, 0.2
  %v103 = vsel %vm101, %v100, %v102
  %104 = vst [vmem:[%s4] sm:$0xff] %v103
  // Predicated region
  $region18: #{d_block_forward.3} parent=0 // pred_check
    _
  $region19: #{d_block_forward.3} parent=0 // pred_check_branch
    %106 = sbr.rel (0) target = $region21
  $region20: #{d_block_forward.3} parent=0 // pred_region
    _
  $region21: #{d_block_forward.3} parent=0 // pred_fallthru
    _
  // Predicated region
  $region22: #{d_block_forward.3} parent=0 // pred_check
    _
  $region23: #{d_block_forward.3} parent=0 // pred_check_branch
    %108 = sbr.rel (0) target = $region25
  $region24: #{d_block_forward.3} parent=0 // pred_region
    _
  $region25: #{d_block_forward.3} parent=0 // pred_fallthru
    _

// kernel: d_block_forward.2
$region0: #{d_block_forward.2}
  #allocation0 [shape = 'u32[]', space=smem, size = 0x4, offset = 0x4, fixed_abs, tag = 'smem constant byte address 0x4 - core index']
  #allocation1 [shape = 'u32[144,128]{1,0:T(1,128)}', space=vmem, size = 0x12000, scoped, tag = 'internal scratch']
  %s0 = inlined_call_operand.vmem [shape: bf16[48,128], index: 0, kind: input, shape index: {}]
  %s1 = inlined_call_operand.vmem [shape: bf16[8,48], index: 1, kind: input, shape index: {}]
  %s2 = inlined_call_operand.vmem [shape: f32[16,128], index: 2, kind: output, shape index: {}]
  %s3 = sld [smem:[#allocation0]]
  $region18: #{d_block_forward.2} parent=0
    _
  %s5 = ssub.s32 1, %s3
  %s6 = scalar_select 0, %s5, %s3
  // Predicated region
  $region2: #{d_block_forward.2} parent=0 // pred_check
    _
  $region3: #{d_block_forward.2} parent=0 // pred_check_branch
    %8 = sbr.rel (0) target = $region5
  $region4: #{d_block_forward.2} parent=0 // pred_region
    _
  $region5: #{d_block_forward.2} parent=0 // pred_fallthru
    _
  // Predicated region
  $region6: #{d_block_forward.2} parent=0 // pred_check
    _
  $region7: #{d_block_forward.2} parent=0 // pred_check_branch
    %10 = sbr.rel (0) target = $region9
  $region8: #{d_block_forward.2} parent=0 // pred_region
    _
  $region9: #{d_block_forward.2} parent=0 // pred_fallthru
    _
  %v12 = vld [vmem:[%s1] sm:$0xf]
  %v13 = vld [vmem:[%s0] sm:$0xf]
  %v14 = vld [vmem:[%s0 + $0x4] sm:$0xf]
  %v15 = vld [vmem:[%s0 + $0x8] sm:$0xf]
  %v16 = vld [vmem:[%s0 + $0xc] sm:$0xf]
  %v17 = vld [vmem:[%s0 + $0x10] sm:$0xf]
  %v18 = vld [vmem:[%s0 + $0x14] sm:$0xf]
  %v25 = vunpack.c.l.b16 %v13
  %v26 = vunpack.c.l.b16 %v14
  %v27 = vunpack.c.l.b16 %v15
  %v28 = vunpack.c.l.b16 %v16
  %v29 = vunpack.c.l.b16 %v17
  %v30 = vunpack.c.l.b16 %v18
  %v31 = vpack.c.b16 %v26, %v25
  %v32 = vpack.c.b16 %v28, %v27
  %v33 = vpack.c.b16 %v30, %v29
  %vm37 = vcmask 392192
  %v39 = vsel %vm37, %v12, 0
  %41 = vmatprep.subr.bf16.mxu0 0
  %42 = vmatpush1.bf16.msra.mxu0 %v31
  %43 = vmatprep.subr.bf16.mxu0 0
  %44 = vmatpush1.bf16.msra.mxu0 %v32
  %45 = vmatprep.subr.bf16.mxu0 0
  %46 = vmatpush1.bf16.msra.mxu0 %v33
  %47 = vmatprep.subr.bf16.mxu0 0
  %48 = vmatpush1.bf16.msra.mxu0 0
  %49 = vmatprep.subr.bf16.mxu0 0
  %50 = vmatpush1.bf16.msra.mxu0 0
  %51 = vmatprep.subr.bf16.mxu0 0
  %52 = vmatpush1.bf16.msra.mxu0 0
  %53 = vmatprep.subr.bf16.mxu0 0
  %54 = vmatpush1.bf16.msra.mxu0 0
  %55 = vmatprep.subr.bf16.mxu0 0
  %56 = vmatpush1.bf16.msra.mxu0 0
  %57 = vmatprep.subr.bf16.mxu0 0
  %58 = vmatpush1.bf16.msra.mxu0 0
  %59 = vmatprep.subr.bf16.mxu0 0
  %60 = vmatpush1.bf16.msra.mxu0 0
  %61 = vmatprep.subr.bf16.mxu0 0
  %62 = vmatpush1.bf16.msra.mxu0 0
  %63 = vmatprep.subr.bf16.mxu0 0
  %64 = vmatpush1.bf16.msra.mxu0 0
  %65 = vmatprep.subr.bf16.mxu0 0
  %66 = vmatpush1.bf16.msra.mxu0 0
  %67 = vmatprep.subr.bf16.mxu0 0
  %68 = vmatpush1.bf16.msra.mxu0 0
  %69 = vmatprep.subr.bf16.mxu0 0
  %70 = vmatpush1.bf16.msra.mxu0 0
  %71 = vmatprep.subr.bf16.mxu0 0
  %72 = vmatpush1.bf16.msra.mxu0 0
  %73 = vmatprep.mubr.bf16.mxu0 0
  %74 = vmatmul.mubr.bf16.gmra.mrb[0].mxu0 %v39
  %v75 = vpop.f32.mrb[0].mxu0
  %v76 = vadd.f32 0.0, %v75
  %v77 = vpop.f32.mrb[0].mxu0
  %v78 = vpop.f32.mrb[0].mxu0
  %v79 = vpop.f32.mrb[0].mxu0
  %80 = vdwg.mxu0
  %81 = vadd.xlane.f32.xlu0 %v76
  %v82 = vpop.xlane.xlu0 %81
  %v83 = vmul.f32 %v76, %v76
  %84 = vadd.xlane.f32.xlu0 %v83
  %v85 = vpop.xlane.xlu0 %84
  %86 = vst [vmem:[%s2] sm:$0xff] %v82
  %87 = vst [vmem:[%s2 + $0x8] sm:$0xff] %v85
  // Predicated region
  $region10: #{d_block_forward.2} parent=0 // pred_check
    _
  $region11: #{d_block_forward.2} parent=0 // pred_check_branch
    %89 = sbr.rel (0) target = $region13
  $region12: #{d_block_forward.2} parent=0 // pred_region
    _
  $region13: #{d_block_forward.2} parent=0 // pred_fallthru
    _
  // Predicated region
  $region14: #{d_block_forward.2} parent=0 // pred_check
    _
  $region15: #{d_block_forward.2} parent=0 // pred_check_branch
    %91 = sbr.rel (0) target = $region17
  $region16: #{d_block_forward.2} parent=0 // pred_region
    _
  $region17: #{d_block_forward.2} parent=0 // pred_fallthru
    _

</llo_original>
